<compile_context>
chip_gen: v7x
topology: tpu7x:2x2x1
jax: 0.10.0
libtpu: 0.0.40
codegen_flags: <defaults>
</compile_context>

<pallas_src>
import jax
import jax.numpy as jnp
from jax import lax
from jax.experimental import pallas as pl
from jax.experimental.pallas import tpu as pltpu
import numpy as np


def _round_up(v, m):
    return (v + m - 1) // m * m


def pool_att_ff_kernel(x_ref, n_ref, w1_ref, b1_ref, w2_ref, b2_ref,
                       w3_ref, b3_ref, out_ref, m_sc, l_sc, acc_sc):
    Bt, Tt, D = x_ref.shape
    t_step = pl.program_id(1)

    @pl.when(t_step == 0)
    def _init():
        m_sc[...] = jnp.full_like(m_sc, -jnp.inf)
        l_sc[...] = jnp.zeros_like(l_sc)
        acc_sc[...] = jnp.zeros_like(acc_sc)

    x = x_ref[...]                                          # (Bt, Tt, D), input dtype
    n = n_ref[...]                                          # (Bt, 1) int32

    # Zero out rows with t >= n_wins. This also neutralizes the undefined rows of a
    # ragged last T block (and keeps their garbage out of the p*x accumulation).
    t3 = t_step * Tt + lax.broadcasted_iota(jnp.int32, (Bt, Tt, D), 1)
    x = jnp.where(t3 < n[:, :, None], x, 0.0)               # (Bt, Tt, D)

    # ---- linear1 + ReLU: batch*time folded into the MXU M dimension -----------
    # (Tt is always a multiple of 8, so the (Bt,Tt,D) <-> (Bt*Tt,D) reshapes are
    #  tile-aligned and free.)
    h = jnp.dot(x.reshape(Bt * Tt, D).astype(w1_ref.dtype), w1_ref[...],
                preferred_element_type=jnp.float32)          # (Bt*Tt, H) f32 accum
    h = jnp.maximum(h + b1_ref[...], 0.0).reshape(Bt, Tt, -1)

    # ---- linear2 -> logits on the VPU/XLU (no Bt tiny M=1 MXU matmuls) ---------
    s = jnp.sum(h * w2_ref[...], axis=-1) + b2_ref[...]      # (Bt, Tt) f32

    # ---- length mask + online softmax over T (flash-style, f32) ----------------
    t2 = t_step * Tt + lax.broadcasted_iota(jnp.int32, (Bt, Tt), 1)
    s = jnp.where(t2 < n, s, -jnp.inf)

    m_prev = m_sc[...]                                       # (Bt, 1)
    m_new = jnp.maximum(m_prev, jnp.max(s, axis=-1, keepdims=True))
    alpha = jnp.exp(m_prev - m_new)                          # (Bt, 1)
    p = jnp.exp(s - m_new)                                   # (Bt, Tt); exact 0 on masked cols
    l_sc[...] = alpha * l_sc[...] + jnp.sum(p, axis=-1, keepdims=True)
    # Attention pooling as VPU broadcast-multiply + sublane reduction (f32 weights).
    acc_sc[...] = alpha * acc_sc[...] + jnp.sum(p[:, :, None] * x, axis=1)   # (Bt, D)
    m_sc[...] = m_new

    @pl.when(t_step == pl.num_programs(1) - 1)
    def _finalize():
        pooled = acc_sc[...] / l_sc[...]                     # (Bt, D) f32, exact div
        w3 = w3_ref[...]                                     # (Dout, D) f32
        if w3_ref.shape[0] == 1:
            # output_size == 1: multiply + lane reduce instead of an M=1 matmul.
            out = jnp.sum(pooled * w3, axis=-1, keepdims=True)        # (Bt, 1)
        else:
            out = lax.dot_general(pooled, w3, (((1,), (1,)), ((), ())),
                                  preferred_element_type=jnp.float32)  # (Bt, Dout)
        out_ref[...] = (out + b3_ref[...]).astype(out_ref.dtype)


def pool_att_ff(x, n_wins, w1, b1, w2, b2, w3, b3, *, compute_dtype=jnp.bfloat16):
    """x: (B, T, D) f32 (bf16 also accepted). n_wins: (B,) int.
    Weights stored as (in, out) = PyTorch W.T. `compute_dtype` is the linear1
    matmul operand dtype; everything else (mask, softmax, pooling, linear3) is f32.
    """
    B, T, D = x.shape
    H = w1.shape[1]
    Dout = w3.shape[1]
    cdt = jnp.dtype(compute_dtype)

    # Very short sequences: pad T up to one sublane tile (tiny one-time copy) so the
    # in-kernel reshapes stay tile-aligned. The length mask neutralizes pad rows.
    if T < 8:
        x = jnp.pad(x, ((0, 0), (0, 8 - T), (0, 0)))
        T = 8

    # ---- T tile: multiple of 8; ragged last block handled by the length mask ----
    Tt = min(512, (T // 8) * 8)
    num_t = pl.cdiv(T, Tt)

    # ---- batch tile: lane-padding-aware VMEM estimate; the x DMA tile drives Bt --
    lane = lambda v: _round_up(v, 128)
    xb = jnp.dtype(x.dtype).itemsize
    # double-buffered x input (2x), masked f32/x-dtype copy, matmul-dtype cast, f32 h,
    # plus slack for iota/mask/logits temporaries.
    per_row = (2 * xb + 4 + cdt.itemsize) * lane(D) + 4 * lane(H) + 1024
    budget = 20 << 20                     # working-set target (scoped limit raised below)
    Bt = max(8, (budget // (Tt * per_row)) // 8 * 8)
    if B > 8:
        # Keep >= 2 batch tiles so the "parallel" axis can feed both v7x TensorCores.
        Bt = min(Bt, _round_up(pl.cdiv(B, 2), 8))
    if Bt >= B:
        Bt = B                            # single batch tile: block == full dim is legal
    num_b = pl.cdiv(B, Bt)

    # Tiny auxiliary arrays (no big HBM copies of x).
    nw = n_wins.reshape(B, 1).astype(jnp.int32)
    w1c = w1.astype(cdt)                                     # (D, H)    matmul operand
    b1f = b1.reshape(1, H).astype(jnp.float32)               # (1, H)
    w2r = w2.reshape(1, H).astype(jnp.float32)               # (1, H)    row vector
    b2f = jnp.asarray(b2, jnp.float32).reshape(1, 1)         # (1, 1)
    w3t = w3.T.astype(jnp.float32)                           # (Dout, D)
    b3f = b3.reshape(1, Dout).astype(jnp.float32)            # (1, Dout)

    out = pl.pallas_call(
        pool_att_ff_kernel,
        out_shape=jax.ShapeDtypeStruct((B, Dout), jnp.float32),
        grid_spec=pltpu.PrefetchScalarGridSpec(
            num_scalar_prefetch=0,
            grid=(num_b, num_t),
            in_specs=[
                pl.BlockSpec((Bt, Tt, D), lambda i, t: (i, t, 0)),   # x (streamed)
                pl.BlockSpec((Bt, 1),     lambda i, t: (i, 0)),      # n_wins
                pl.BlockSpec((D, H),      lambda i, t: (0, 0)),      # w1
                pl.BlockSpec((1, H),      lambda i, t: (0, 0)),      # b1
                pl.BlockSpec((1, H),      lambda i, t: (0, 0)),      # w2 (row)
                pl.BlockSpec((1, 1),      lambda i, t: (0, 0)),      # b2
                pl.BlockSpec((Dout, D),   lambda i, t: (0, 0)),      # w3 (PyTorch layout)
                pl.BlockSpec((1, Dout),   lambda i, t: (0, 0)),      # b3
            ],
            out_specs=pl.BlockSpec((Bt, Dout), lambda i, t: (i, 0)),
            scratch_shapes=[
                pltpu.VMEM((Bt, 1), jnp.float32),    # running max
                pltpu.VMEM((Bt, 1), jnp.float32),    # running denom
                pltpu.VMEM((Bt, D), jnp.float32),    # running weighted sum of x
            ],
        ),
        compiler_params=pltpu.CompilerParams(
            dimension_semantics=("parallel", "arbitrary"),
            vmem_limit_bytes=48 << 20,
        ),
    )(x, nw, w1c, b1f, w2r, b2f, w3t, b3f)
    return out                                               # (B, Dout) f32


def pool_att_ff_reference(x, n_wins, w1, b1, w2, b2, w3, b3):
    """Pure-JAX reference mirroring the PyTorch forward."""
    att = jnp.maximum(x @ w1 + b1, 0.0) @ w2 + b2             # (B, T, 1)
    att = jnp.swapaxes(att, 2, 1)                             # (B, 1, T)
    mask = jnp.arange(att.shape[2])[None, :] < n_wins[:, None]
    att = jnp.where(mask[:, None, :], att, -jnp.inf)
    att = jax.nn.softmax(att, axis=2)
    pooled = jnp.einsum("bot,btd->bod", att, x)[:, 0]         # (B, D)
    return pooled @ w3 + b3


if __name__ == "__main__":
    # Small shapes consistent with the module: d_input=32, h=16, output_size=1.
    # B=3 / T=11 exercise the ragged T-block + online-softmax + length-mask paths.
    B, T, D, H, DOUT = 3, 11, 32, 16, 1

    key = jax.random.PRNGKey(0)
    kx, k1, kb1, k2, kb2, k3, kb3 = jax.random.split(key, 7)

    x = jax.random.normal(kx, (B, T, D), dtype=jnp.float32)
    n_wins = jnp.array([T, 5, 1], dtype=jnp.int32)            # valid lengths per batch
    # NOTE: n_wins[b] == 0 yields NaN (all -inf softmax), matching the PyTorch reference.

    # Parameters stored as (in, out), i.e. PyTorch W.T.
    w1 = jax.random.normal(k1, (D, H), dtype=jnp.float32) * 0.1
    b1 = jax.random.normal(kb1, (1, H), dtype=jnp.float32) * 0.1
    w2 = jax.random.normal(k2, (H, 1), dtype=jnp.float32) * 0.1
    b2 = jax.random.normal(kb2, (1, 1), dtype=jnp.float32) * 0.1
    w3 = jax.random.normal(k3, (D, DOUT), dtype=jnp.float32) * 0.1
    b3 = jax.random.normal(kb3, (1, DOUT), dtype=jnp.float32) * 0.1

    ref = pool_att_ff_reference(x, n_wins, w1, b1, w2, b2, w3, b3)

    # f32 compute path (matmul operands stay f32).
    out_f32 = jax.block_until_ready(
        pool_att_ff(x, n_wins, w1, b1, w2, b2, w3, b3, compute_dtype=jnp.float32))
    np.testing.assert_allclose(np.asarray(out_f32), np.asarray(ref),
                               rtol=1e-2, atol=1e-2)

    # bf16 compute path (default / performance configuration; only linear1 is bf16).
    out_bf16 = jax.block_until_ready(
        pool_att_ff(x, n_wins, w1, b1, w2, b2, w3, b3))
    np.testing.assert_allclose(np.asarray(out_bf16), np.asarray(ref),
                               rtol=5e-2, atol=5e-2)

    # TODO(synk): nn.Dropout is identity here (eval mode); train-mode dropout not implemented.
    print("KERNEL_OK")
</pallas_src>

<mosaic_0001>
module attributes {stable_mosaic.version = 11 : i64} {
  func.func @pool_att_ff_kernel(%arg0: i32, %arg1: i32, %arg2: memref<3x8x32xf32, #tpu.memory_space<vmem>>, %arg3: memref<3x1xi32, #tpu.memory_space<vmem>>, %arg4: memref<32x16xf32, #tpu.memory_space<vmem>>, %arg5: memref<1x16xf32, #tpu.memory_space<vmem>>, %arg6: memref<1x16xf32, #tpu.memory_space<vmem>>, %arg7: memref<1x1xf32, #tpu.memory_space<vmem>>, %arg8: memref<1x32xf32, #tpu.memory_space<vmem>>, %arg9: memref<1x1xf32, #tpu.memory_space<vmem>>, %arg10: memref<3x1xf32, #tpu.memory_space<vmem>>, %arg11: memref<3x1xf32, #tpu.memory_space<vmem>>, %arg12: memref<3x1xf32, #tpu.memory_space<vmem>>, %arg13: memref<3x32xf32, #tpu.memory_space<vmem>>) attributes {dimension_semantics = [#tpu.dimension_semantics<parallel>, #tpu.dimension_semantics<arbitrary>], iteration_bounds = array<i64: 1, 2>, scalar_prefetch = 0 : i64, scratch_operands = 3 : i64, tpu.core_type = #tpu.core_type<tc>, window_params = [{transform_indices = @transform_0, window_bounds = array<i64: 3, 8, 32>}, {transform_indices = @transform_1, window_bounds = array<i64: 3, 1>}, {pipeline_mode = #tpu.pipeline_mode<synchronous>, transform_indices = @transform_2, window_bounds = array<i64: 32, 16>}, {pipeline_mode = #tpu.pipeline_mode<synchronous>, transform_indices = @transform_3, window_bounds = array<i64: 1, 16>}, {pipeline_mode = #tpu.pipeline_mode<synchronous>, transform_indices = @transform_4, window_bounds = array<i64: 1, 16>}, {pipeline_mode = #tpu.pipeline_mode<synchronous>, transform_indices = @transform_5, window_bounds = array<i64: 1, 1>}, {pipeline_mode = #tpu.pipeline_mode<synchronous>, transform_indices = @transform_6, window_bounds = array<i64: 1, 32>}, {pipeline_mode = #tpu.pipeline_mode<synchronous>, transform_indices = @transform_7, window_bounds = array<i64: 1, 1>}, {transform_indices = @transform_8, window_bounds = array<i64: 3, 1>}]} {
    %c0_i32 = arith.constant 0 : i32
    %0 = arith.cmpi eq, %arg1, %c0_i32 : i32
    %1 = arith.extui %0 : i1 to i32
    %c0_i32_0 = arith.constant 0 : i32
    %2 = arith.cmpi ne, %1, %c0_i32_0 : i32
    scf.if %2 {
      %cst_34 = arith.constant 0xFF800000 : f32
      %67 = vector.broadcast %cst_34 : f32 to vector<3x1xf32>
      %c0_35 = arith.constant 0 : index
      %c0_36 = arith.constant 0 : index
      %68 = vector.load %arg11[%c0_35, %c0_36] : memref<3x1xf32, #tpu.memory_space<vmem>>, vector<3x1xf32>
      tpu.vector_store %arg11[%c0_35, %c0_36], %67 {strides = array<i32>} : memref<3x1xf32, #tpu.memory_space<vmem>>, vector<3x1xf32>,
      %cst_37 = arith.constant 0.000000e+00 : f32
      %69 = vector.broadcast %cst_37 : f32 to vector<3x1xf32>
      %c0_38 = arith.constant 0 : index
      %c0_39 = arith.constant 0 : index
      %70 = vector.load %arg12[%c0_38, %c0_39] : memref<3x1xf32, #tpu.memory_space<vmem>>, vector<3x1xf32>
      tpu.vector_store %arg12[%c0_38, %c0_39], %69 {strides = array<i32>} : memref<3x1xf32, #tpu.memory_space<vmem>>, vector<3x1xf32>,
      %cst_40 = arith.constant 0.000000e+00 : f32
      %71 = vector.broadcast %cst_40 : f32 to vector<3x32xf32>
      %c0_41 = arith.constant 0 : index
      %c0_42 = arith.constant 0 : index
      %72 = vector.load %arg13[%c0_41, %c0_42] : memref<3x32xf32, #tpu.memory_space<vmem>>, vector<3x32xf32>
      tpu.vector_store %arg13[%c0_41, %c0_42], %71 {strides = array<i32>} : memref<3x32xf32, #tpu.memory_space<vmem>>, vector<3x32xf32>,
    } else {
    }
    %c0 = arith.constant 0 : index
    %c0_1 = arith.constant 0 : index
    %c0_2 = arith.constant 0 : index
    %3 = vector.load %arg2[%c0, %c0_1, %c0_2] : memref<3x8x32xf32, #tpu.memory_space<vmem>>, vector<3x8x32xf32>
    %c0_3 = arith.constant 0 : index
    %c0_4 = arith.constant 0 : index
    %4 = vector.load %arg3[%c0_3, %c0_4] : memref<3x1xi32, #tpu.memory_space<vmem>>, vector<3x1xi32>
    %c8_i32 = arith.constant 8 : i32
    %5 = arith.muli %arg1, %c8_i32 : i32
    %6 = tpu.iota {dimensions = array<i32: 1>} : vector<3x8x32xi32>
    %7 = vector.broadcast %5 : i32 to vector<3x8x32xi32>
    %8 = arith.addi %7, %6 : vector<3x8x32xi32>
    %9 = vector.shape_cast %4 : vector<3x1xi32> to vector<3x1x1xi32>
    %10 = vector.broadcast %9 : vector<3x1x1xi32> to vector<3x8x32xi32>
    %11 = arith.cmpi slt, %8, %10 : vector<3x8x32xi32>
    %cst = arith.constant 0.000000e+00 : f32
    %12 = vector.broadcast %cst : f32 to vector<3x8x32xf32>
    %13 = arith.select %11, %3, %12 : vector<3x8x32xi1>, vector<3x8x32xf32>
    %14 = vector.shape_cast %13 : vector<3x8x32xf32> to vector<24x32xf32>
    %c0_5 = arith.constant 0 : index
    %c0_6 = arith.constant 0 : index
    %15 = vector.load %arg4[%c0_5, %c0_6] : memref<32x16xf32, #tpu.memory_space<vmem>>, vector<32x16xf32>
    %cst_7 = arith.constant dense<0.000000e+00> : vector<24x16xf32>
    %16 = tpu.matmul %14, %15, %cst_7 {dimension_numbers = #tpu.dot_dimension_numbers<[1], [0], [0], [1], [0, 0, 1, 1], [], []>} : vector<24x32xf32>, vector<32x16xf32>, vector<24x16xf32> -> vector<24x16xf32>
    %c0_8 = arith.constant 0 : index
    %c0_9 = arith.constant 0 : index
    %17 = vector.load %arg5[%c0_8, %c0_9] : memref<1x16xf32, #tpu.memory_space<vmem>>, vector<1x16xf32>
    %18 = vector.broadcast %17 : vector<1x16xf32> to vector<24x16xf32>
    %19 = arith.addf %16, %18 : vector<24x16xf32>
    %cst_10 = arith.constant 0.000000e+00 : f32
    %20 = vector.broadcast %cst_10 : f32 to vector<24x16xf32>
    %21 = arith.maximumf %19, %20 : vector<24x16xf32>
    %22 = vector.shape_cast %21 : vector<24x16xf32> to vector<3x8x16xf32>
    %c0_11 = arith.constant 0 : index
    %c0_12 = arith.constant 0 : index
    %23 = vector.load %arg6[%c0_11, %c0_12] : memref<1x16xf32, #tpu.memory_space<vmem>>, vector<1x16xf32>
    %24 = vector.shape_cast %23 : vector<1x16xf32> to vector<1x1x16xf32>
    %25 = vector.broadcast %24 : vector<1x1x16xf32> to vector<3x8x16xf32>
    %26 = arith.mulf %22, %25 : vector<3x8x16xf32>
    %cst_13 = arith.constant dense<0.000000e+00> : vector<3x8xf32>
    %27 = vector.multi_reduction <add>, %26, %cst_13 [2] : vector<3x8x16xf32> to vector<3x8xf32>
    %c0_14 = arith.constant 0 : index
    %c0_15 = arith.constant 0 : index
    %28 = vector.load %arg7[%c0_14, %c0_15] : memref<1x1xf32, #tpu.memory_space<vmem>>, vector<1x1xf32>
    %29 = vector.broadcast %28 : vector<1x1xf32> to vector<3x8xf32>
    %30 = arith.addf %27, %29 : vector<3x8xf32>
    %c8_i32_16 = arith.constant 8 : i32
    %31 = arith.muli %arg1, %c8_i32_16 : i32
    %32 = tpu.iota {dimensions = array<i32: 1>} : vector<3x8xi32>
    %33 = vector.broadcast %31 : i32 to vector<3x8xi32>
    %34 = arith.addi %33, %32 : vector<3x8xi32>
    %35 = vector.broadcast %4 : vector<3x1xi32> to vector<3x8xi32>
    %36 = arith.cmpi slt, %34, %35 : vector<3x8xi32>
    %cst_17 = arith.constant 0xFF800000 : f32
    %37 = vector.broadcast %cst_17 : f32 to vector<3x8xf32>
    %38 = arith.select %36, %30, %37 : vector<3x8xi1>, vector<3x8xf32>
    %c0_18 = arith.constant 0 : index
    %c0_19 = arith.constant 0 : index
    %39 = vector.load %arg11[%c0_18, %c0_19] : memref<3x1xf32, #tpu.memory_space<vmem>>, vector<3x1xf32>
    %cst_20 = arith.constant dense<0xFF800000> : vector<3xf32>
    %40 = vector.multi_reduction <maximumf>, %38, %cst_20 [1] : vector<3x8xf32> to vector<3xf32>
    %41 = vector.shape_cast %40 : vector<3xf32> to vector<3x1xf32>
    %42 = arith.maximumf %39, %41 : vector<3x1xf32>
    %43 = arith.subf %39, %42 : vector<3x1xf32>
    %44 = math.exp %43 : vector<3x1xf32>
    %45 = vector.broadcast %42 : vector<3x1xf32> to vector<3x8xf32>
    %46 = arith.subf %38, %45 : vector<3x8xf32>
    %47 = math.exp %46 : vector<3x8xf32>
    %c0_21 = arith.constant 0 : index
    %c0_22 = arith.constant 0 : index
    %48 = vector.load %arg12[%c0_21, %c0_22] : memref<3x1xf32, #tpu.memory_space<vmem>>, vector<3x1xf32>
    %49 = arith.mulf %44, %48 : vector<3x1xf32>
    %cst_23 = arith.constant dense<0.000000e+00> : vector<3xf32>
    %50 = vector.multi_reduction <add>, %47, %cst_23 [1] : vector<3x8xf32> to vector<3xf32>
    %51 = vector.shape_cast %50 : vector<3xf32> to vector<3x1xf32>
    %52 = arith.addf %49, %51 : vector<3x1xf32>
    %c0_24 = arith.constant 0 : index
    %c0_25 = arith.constant 0 : index
    %53 = vector.load %arg12[%c0_24, %c0_25] : memref<3x1xf32, #tpu.memory_space<vmem>>, vector<3x1xf32>
    tpu.vector_store %arg12[%c0_24, %c0_25], %52 {strides = array<i32>} : memref<3x1xf32, #tpu.memory_space<vmem>>, vector<3x1xf32>,
    %c0_26 = arith.constant 0 : index
    %c0_27 = arith.constant 0 : index
    %54 = vector.load %arg13[%c0_26, %c0_27] : memref<3x32xf32, #tpu.memory_space<vmem>>, vector<3x32xf32>
    %55 = vector.broadcast %44 : vector<3x1xf32> to vector<3x32xf32>
    %56 = arith.mulf %55, %54 : vector<3x32xf32>
    %57 = vector.shape_cast %47 : vector<3x8xf32> to vector<3x8x1xf32>
    %58 = vector.broadcast %57 : vector<3x8x1xf32> to vector<3x8x32xf32>
    %59 = arith.mulf %58, %13 : vector<3x8x32xf32>
    %cst_28 = arith.constant dense<0.000000e+00> : vector<3x32xf32>
    %60 = vector.multi_reduction <add>, %59, %cst_28 [1] : vector<3x8x32xf32> to vector<3x32xf32>
    %61 = arith.addf %56, %60 : vector<3x32xf32>
    %c0_29 = arith.constant 0 : index
    %c0_30 = arith.constant 0 : index
    %62 = vector.load %arg13[%c0_29, %c0_30] : memref<3x32xf32, #tpu.memory_space<vmem>>, vector<3x32xf32>
    tpu.vector_store %arg13[%c0_29, %c0_30], %61 {strides = array<i32>} : memref<3x32xf32, #tpu.memory_space<vmem>>, vector<3x32xf32>,
    %c0_31 = arith.constant 0 : index
    %c0_32 = arith.constant 0 : index
    %63 = vector.load %arg11[%c0_31, %c0_32] : memref<3x1xf32, #tpu.memory_space<vmem>>, vector<3x1xf32>
    tpu.vector_store %arg11[%c0_31, %c0_32], %42 {strides = array<i32>} : memref<3x1xf32, #tpu.memory_space<vmem>>, vector<3x1xf32>,
    %c1_i32 = arith.constant 1 : i32
    %64 = arith.cmpi eq, %arg1, %c1_i32 : i32
    %65 = arith.extui %64 : i1 to i32
    %c0_i32_33 = arith.constant 0 : i32
    %66 = arith.cmpi ne, %65, %c0_i32_33 : i32
    scf.if %66 {
      %c0_34 = arith.constant 0 : index
      %c0_35 = arith.constant 0 : index
      %67 = vector.load %arg13[%c0_34, %c0_35] : memref<3x32xf32, #tpu.memory_space<vmem>>, vector<3x32xf32>
      %c0_36 = arith.constant 0 : index
      %c0_37 = arith.constant 0 : index
      %68 = vector.load %arg12[%c0_36, %c0_37] : memref<3x1xf32, #tpu.memory_space<vmem>>, vector<3x1xf32>
      %69 = vector.broadcast %68 : vector<3x1xf32> to vector<3x32xf32>
      %70 = arith.divf %67, %69 : vector<3x32xf32>
      %c0_38 = arith.constant 0 : index
      %c0_39 = arith.constant 0 : index
      %71 = vector.load %arg8[%c0_38, %c0_39] : memref<1x32xf32, #tpu.memory_space<vmem>>, vector<1x32xf32>
      %72 = vector.broadcast %71 : vector<1x32xf32> to vector<3x32xf32>
      %73 = arith.mulf %70, %72 : vector<3x32xf32>
      %cst_40 = arith.constant dense<0.000000e+00> : vector<3xf32>
      %74 = vector.multi_reduction <add>, %73, %cst_40 [1] : vector<3x32xf32> to vector<3xf32>
      %75 = vector.shape_cast %74 : vector<3xf32> to vector<3x1xf32>
      %c0_41 = arith.constant 0 : index
      %c0_42 = arith.constant 0 : index
      %76 = vector.load %arg9[%c0_41, %c0_42] : memref<1x1xf32, #tpu.memory_space<vmem>>, vector<1x1xf32>
      %77 = vector.broadcast %76 : vector<1x1xf32> to vector<3x1xf32>
      %78 = arith.addf %75, %77 : vector<3x1xf32>
      %c0_43 = arith.constant 0 : index
      %c0_44 = arith.constant 0 : index
      %79 = vector.load %arg10[%c0_43, %c0_44] : memref<3x1xf32, #tpu.memory_space<vmem>>, vector<3x1xf32>
      tpu.vector_store %arg10[%c0_43, %c0_44], %78 {strides = array<i32>} : memref<3x1xf32, #tpu.memory_space<vmem>>, vector<3x1xf32>,
    } else {
    }
    return
  }
  func.func @transform_0(%arg0: i32, %arg1: i32) -> (i32, i32, i32) {
    %c0_i32 = arith.constant 0 : i32
    %c0_i32_0 = arith.constant 0 : i32
    return %arg0, %arg1, %c0_i32 : i32, i32, i32
  }
  func.func @transform_1(%arg0: i32, %arg1: i32) -> (i32, i32) {
    %c0_i32 = arith.constant 0 : i32
    %c0_i32_0 = arith.constant 0 : i32
    return %arg0, %c0_i32 : i32, i32
  }
  func.func @transform_2(%arg0: i32, %arg1: i32) -> (i32, i32) {
    %c0_i32 = arith.constant 0 : i32
    %c0_i32_0 = arith.constant 0 : i32
    %c0_i32_1 = arith.constant 0 : i32
    return %c0_i32, %c0_i32_0 : i32, i32
  }
  func.func @transform_3(%arg0: i32, %arg1: i32) -> (i32, i32) {
    %c0_i32 = arith.constant 0 : i32
    %c0_i32_0 = arith.constant 0 : i32
    %c0_i32_1 = arith.constant 0 : i32
    return %c0_i32, %c0_i32_0 : i32, i32
  }
  func.func @transform_4(%arg0: i32, %arg1: i32) -> (i32, i32) {
    %c0_i32 = arith.constant 0 : i32
    %c0_i32_0 = arith.constant 0 : i32
    %c0_i32_1 = arith.constant 0 : i32
    return %c0_i32, %c0_i32_0 : i32, i32
  }
  func.func @transform_5(%arg0: i32, %arg1: i32) -> (i32, i32) {
    %c0_i32 = arith.constant 0 : i32
    %c0_i32_0 = arith.constant 0 : i32
    %c0_i32_1 = arith.constant 0 : i32
    return %c0_i32, %c0_i32_0 : i32, i32
  }
  func.func @transform_6(%arg0: i32, %arg1: i32) -> (i32, i32) {
    %c0_i32 = arith.constant 0 : i32
    %c0_i32_0 = arith.constant 0 : i32
    %c0_i32_1 = arith.constant 0 : i32
    return %c0_i32, %c0_i32_0 : i32, i32
  }
  func.func @transform_7(%arg0: i32, %arg1: i32) -> (i32, i32) {
    %c0_i32 = arith.constant 0 : i32
    %c0_i32_0 = arith.constant 0 : i32
    %c0_i32_1 = arith.constant 0 : i32
    return %c0_i32, %c0_i32_0 : i32, i32
  }
  func.func @transform_8(%arg0: i32, %arg1: i32) -> (i32, i32) {
    %c0_i32 = arith.constant 0 : i32
    %c0_i32_0 = arith.constant 0 : i32
    return %arg0, %c0_i32 : i32, i32
  }
}

</mosaic_0001>

<llo_original>
// kernel: tpu_custom_call.1
$region0: #{tpu_custom_call.1}
  #allocation0 [shape = 'u32[]', space=smem, size = 0x4, offset = 0x4, fixed_abs, tag = 'smem constant byte address 0x4 - core index']
  #allocation1 [shape = 'u32[144,128]{1,0:T(1,128)}', space=vmem, size = 0x12000, scoped, tag = 'internal scratch']
  #allocation2 [shape = 'f32[3,1]{1,0:T(4,128)}', space=vmem, size = 0x800, scoped, tag = 'scratch operand']
  #allocation3 [shape = 'f32[3,1]{1,0:T(4,128)}', space=vmem, size = 0x800, scoped, tag = 'scratch operand']
  #allocation4 [shape = 'f32[3,32]{1,0:T(4,128)}', space=vmem, size = 0x800, scoped, tag = 'scratch operand']
  #allocation5 [shape = 'f32[1,1]{1,0:T(1,128)S(1)}', space=vmem, size = 0x200, scoped, tag = 'scoped memory for tpu_custom_call.1']
  #allocation6 [shape = 'f32[1,1]{1,0:T(1,128)S(1)}', space=vmem, size = 0x200, scoped, tag = 'scoped memory for tpu_custom_call.1']
  %s0 = inlined_call_operand.vmem [shape: f32[3,11,32], index: 0, kind: input, shape index: {}]
  %s1 = inlined_call_operand.vmem [shape: s32[3,1], index: 1, kind: input, shape index: {}]
  %s2 = inlined_call_operand.vmem [shape: f32[32,16], index: 2, kind: input, shape index: {}]
  %s3 = inlined_call_operand.vmem [shape: f32[1,16], index: 3, kind: input, shape index: {}]
  %s4 = inlined_call_operand.vmem [shape: f32[1,16], index: 4, kind: input, shape index: {}]
  %s5 = inlined_call_operand.<no memory space> [shape: f32[1,1], index: 5, kind: input, shape index: {}]
  %s6 = inlined_call_operand.vmem [shape: f32[1,32], index: 6, kind: input, shape index: {}]
  %s7 = inlined_call_operand.<no memory space> [shape: f32[1,1], index: 7, kind: input, shape index: {}]
  %s8 = inlined_call_operand.vmem [shape: f32[3,1], index: 8, kind: output, shape index: {}]
  %s9 = sld [smem:[#allocation0]]
  $region111: #{tpu_custom_call.1} parent=0
    _
  %s11 = ssub.s32 1, %s9
  %s12 = scalar_select 0, %s11, %s9
  %v13 = vstv %s5
  %14 = vst [vmem:[#allocation5] sm:$0x1] %v13
  %v15 = vstv %s7
  %16 = vst [vmem:[#allocation6] sm:$0x1] %v15
  $region1: #{tpu_custom_call.1} parent=0
    #allocation7 [shape = 'u8[24576]{0}', space=vmem, size = 0x6000, scoped, tag = 'input window, operand 0']
    loop: start=0, step=1, limit=4
    $region2: #{tpu_custom_call.1} parent=1 // loop_pre_header
      _
    $region3: #{tpu_custom_call.1} parent=1 // loop_header
      %s18 = sphi 0, %s22
      %p19 = scmp.ge.s32.totalorder %s18, 4
      %s25 = sphi 0, %s37
      %s26 = sphi 0, %s33
      %s27 = sphi 0, %s25
      %s28 = sphi 0, %s26
      %s29 = sphi 0, %s27
      %s30 = sphi 0, %s28
      %s42 = sphi 0, %s44
      %s45 = sphi 0, %s42
      %s46 = sphi 0, %s45
      %s62 = sphi 0, %s46
      %s68 = sphi 0, %s70
      %s71 = sphi 0, %s68
      %s72 = sphi 0, %s71
      %s88 = sphi 0, %s72
      %s92 = sphi 0, %s92
      %s94 = sphi 0, %s92
      %s95 = sphi 0, %s94
      %s109 = sphi 0, %s95
      %s113 = sphi 0, %s113
      %s115 = sphi 0, %s113
      %s116 = sphi 0, %s115
      %s130 = sphi 0, %s116
      %s134 = sphi 0, %s134
      %s136 = sphi 0, %s134
      %s137 = sphi 0, %s136
      %s151 = sphi 0, %s137
      %s155 = sphi 0, %s155
      %s157 = sphi 0, %s155
      %s158 = sphi 0, %s157
      %s172 = sphi 0, %s158
      %s176 = sphi 0, %s176
      %s178 = sphi 0, %s176
      %s179 = sphi 0, %s178
      %s193 = sphi 0, %s179
      %s197 = sphi 0, %s197
      %s199 = sphi 0, %s197
      %s200 = sphi 0, %s199
      %s214 = sphi 0, %s200
      %s220 = sphi 0, %s222
      %s223 = sphi 0, %s220
      %s224 = sphi 0, %s223
      %s240 = sphi 0, %s224
    $region4: #{tpu_custom_call.1} parent=1 // loop_header_branch
      %21 = sbr.rel (%p19) target = $region8
    $region5: #{tpu_custom_call.1} parent=1 // loop_body
      %s23 = ssub.s32 %s18, 1
      %s24 = ssub.s32 %s18, 2
      %s31 = sadd.s32 1, %s26
      %p32 = scmp.ge.s32.totalorder %s31, 2
      %s33 = scalar_select %p32, 0, %s31
      %s34 = sadd.s32 1, %s25
      %s35 = scalar_select %p32, %s34, %s25
      %p36 = scmp.ge.s32.totalorder %s35, 1
      %s37 = scalar_select %p36, 0, %s35
      %s38 = ssub.s32 %s25, %s37
      %s39 = ssub.s32 %s26, %s33
      %s40 = sor.u32 %s38, %s39
      %p41 = scmp.eq.s32.totalorder %s40, 0
      %s43 = sadd.s32 %s42, 1
      %s44 = scalar_select %p41, %s42, %s43
      %p47 = pneg %p41
      %p48 = scmp.eq.s32.totalorder %s18, 1
      %p49 = por %p47, %p48
      %p50 = scmp.ne.s32.totalorder %s42, %s45
      %p51 = scmp.eq.s32.totalorder %s18, 0
      %p52 = por %p50, %p51
      %p53 = scmp.ne.s32.totalorder %s42, %s45
      %p54 = scmp.eq.s32.totalorder %s23, 1
      %p55 = por %p53, %p54
      %p56 = scmp.ne.s32.totalorder %s45, %s46
      %p57 = scmp.eq.s32.totalorder %s23, 0
      %p58 = por %p56, %p57
      %p59 = scmp.ne.s32.totalorder %s45, %s46
      %p60 = scmp.eq.s32.totalorder %s24, 1
      %p61 = por %p59, %p60
      %p63 = scmp.ne.s32.totalorder %s46, %s62
      %p64 = scmp.eq.s32.totalorder %s24, 0
      %p65 = por %p63, %p64
      %s66 = ssub.s32 %s25, %s37
      %p67 = scmp.eq.s32.totalorder %s66, 0
      %s69 = sadd.s32 %s68, 1
      %s70 = scalar_select %p67, %s68, %s69
      %p73 = pneg %p67
      %p74 = scmp.eq.s32.totalorder %s18, 1
      %p75 = por %p73, %p74
      %p76 = scmp.ne.s32.totalorder %s68, %s71
      %p77 = scmp.eq.s32.totalorder %s18, 0
      %p78 = por %p76, %p77
      %p79 = scmp.ne.s32.totalorder %s68, %s71
      %p80 = scmp.eq.s32.totalorder %s23, 1
      %p81 = por %p79, %p80
      %p82 = scmp.ne.s32.totalorder %s71, %s72
      %p83 = scmp.eq.s32.totalorder %s23, 0
      %p84 = por %p82, %p83
      %p85 = scmp.ne.s32.totalorder %s71, %s72
      %p86 = scmp.eq.s32.totalorder %s24, 1
      %p87 = por %p85, %p86
      %p89 = scmp.ne.s32.totalorder %s72, %s88
      %p90 = scmp.eq.s32.totalorder %s24, 0
      %p91 = por %p89, %p90
      %s93 = sadd.s32 %s92, 1
      %p96 = scmp.eq.s32.totalorder %s18, 1
      %p97 = scmp.ne.s32.totalorder %s92, %s94
      %p98 = scmp.eq.s32.totalorder %s18, 0
      %p99 = por %p97, %p98
      %p100 = scmp.ne.s32.totalorder %s92, %s94
      %p101 = scmp.eq.s32.totalorder %s23, 1
      %p102 = por %p100, %p101
      %p103 = scmp.ne.s32.totalorder %s94, %s95
      %p104 = scmp.eq.s32.totalorder %s23, 0
      %p105 = por %p103, %p104
      %p106 = scmp.ne.s32.totalorder %s94, %s95
      %p107 = scmp.eq.s32.totalorder %s24, 1
      %p108 = por %p106, %p107
      %p110 = scmp.ne.s32.totalorder %s95, %s109
      %p111 = scmp.eq.s32.totalorder %s24, 0
      %p112 = por %p110, %p111
      %s114 = sadd.s32 %s113, 1
      %p117 = scmp.eq.s32.totalorder %s18, 1
      %p118 = scmp.ne.s32.totalorder %s113, %s115
      %p119 = scmp.eq.s32.totalorder %s18, 0
      %p120 = por %p118, %p119
      %p121 = scmp.ne.s32.totalorder %s113, %s115
      %p122 = scmp.eq.s32.totalorder %s23, 1
      %p123 = por %p121, %p122
      %p124 = scmp.ne.s32.totalorder %s115, %s116
      %p125 = scmp.eq.s32.totalorder %s23, 0
      %p126 = por %p124, %p125
      %p127 = scmp.ne.s32.totalorder %s115, %s116
      %p128 = scmp.eq.s32.totalorder %s24, 1
      %p129 = por %p127, %p128
      %p131 = scmp.ne.s32.totalorder %s116, %s130
      %p132 = scmp.eq.s32.totalorder %s24, 0
      %p133 = por %p131, %p132
      %s135 = sadd.s32 %s134, 1
      %p138 = scmp.eq.s32.totalorder %s18, 1
      %p139 = scmp.ne.s32.totalorder %s134, %s136
      %p140 = scmp.eq.s32.totalorder %s18, 0
      %p141 = por %p139, %p140
      %p142 = scmp.ne.s32.totalorder %s134, %s136
      %p143 = scmp.eq.s32.totalorder %s23, 1
      %p144 = por %p142, %p143
      %p145 = scmp.ne.s32.totalorder %s136, %s137
      %p146 = scmp.eq.s32.totalorder %s23, 0
      %p147 = por %p145, %p146
      %p148 = scmp.ne.s32.totalorder %s136, %s137
      %p149 = scmp.eq.s32.totalorder %s24, 1
      %p150 = por %p148, %p149
      %p152 = scmp.ne.s32.totalorder %s137, %s151
      %p153 = scmp.eq.s32.totalorder %s24, 0
      %p154 = por %p152, %p153
      %s156 = sadd.s32 %s155, 1
      %p159 = scmp.eq.s32.totalorder %s18, 1
      %p160 = scmp.ne.s32.totalorder %s155, %s157
      %p161 = scmp.eq.s32.totalorder %s18, 0
      %p162 = por %p160, %p161
      %p163 = scmp.ne.s32.totalorder %s155, %s157
      %p164 = scmp.eq.s32.totalorder %s23, 1
      %p165 = por %p163, %p164
      %p166 = scmp.ne.s32.totalorder %s157, %s158
      %p167 = scmp.eq.s32.totalorder %s23, 0
      %p168 = por %p166, %p167
      %p169 = scmp.ne.s32.totalorder %s157, %s158
      %p170 = scmp.eq.s32.totalorder %s24, 1
      %p171 = por %p169, %p170
      %p173 = scmp.ne.s32.totalorder %s158, %s172
      %p174 = scmp.eq.s32.totalorder %s24, 0
      %p175 = por %p173, %p174
      %s177 = sadd.s32 %s176, 1
      %p180 = scmp.eq.s32.totalorder %s18, 1
      %p181 = scmp.ne.s32.totalorder %s176, %s178
      %p182 = scmp.eq.s32.totalorder %s18, 0
      %p183 = por %p181, %p182
      %p184 = scmp.ne.s32.totalorder %s176, %s178
      %p185 = scmp.eq.s32.totalorder %s23, 1
      %p186 = por %p184, %p185
      %p187 = scmp.ne.s32.totalorder %s178, %s179
      %p188 = scmp.eq.s32.totalorder %s23, 0
      %p189 = por %p187, %p188
      %p190 = scmp.ne.s32.totalorder %s178, %s179
      %p191 = scmp.eq.s32.totalorder %s24, 1
      %p192 = por %p190, %p191
      %p194 = scmp.ne.s32.totalorder %s179, %s193
      %p195 = scmp.eq.s32.totalorder %s24, 0
      %p196 = por %p194, %p195
      %s198 = sadd.s32 %s197, 1
      %p201 = scmp.eq.s32.totalorder %s18, 1
      %p202 = scmp.ne.s32.totalorder %s197, %s199
      %p203 = scmp.eq.s32.totalorder %s18, 0
      %p204 = por %p202, %p203
      %p205 = scmp.ne.s32.totalorder %s197, %s199
      %p206 = scmp.eq.s32.totalorder %s23, 1
      %p207 = por %p205, %p206
      %p208 = scmp.ne.s32.totalorder %s199, %s200
      %p209 = scmp.eq.s32.totalorder %s23, 0
      %p210 = por %p208, %p209
      %p211 = scmp.ne.s32.totalorder %s199, %s200
      %p212 = scmp.eq.s32.totalorder %s24, 1
      %p213 = por %p211, %p212
      %p215 = scmp.ne.s32.totalorder %s200, %s214
      %p216 = scmp.eq.s32.totalorder %s24, 0
      %p217 = por %p215, %p216
      %s218 = ssub.s32 %s25, %s37
      %p219 = scmp.eq.s32.totalorder %s218, 0
      %s221 = sadd.s32 %s220, 1
      %s222 = scalar_select %p219, %s220, %s221
      %p225 = pneg %p219
      %p226 = scmp.eq.s32.totalorder %s18, 1
      %p227 = por %p225, %p226
      %p228 = scmp.ne.s32.totalorder %s220, %s223
      %p229 = scmp.eq.s32.totalorder %s18, 0
      %p230 = por %p228, %p229
      %p231 = scmp.ne.s32.totalorder %s220, %s223
      %p232 = scmp.eq.s32.totalorder %s23, 1
      %p233 = por %p231, %p232
      %p234 = scmp.ne.s32.totalorder %s223, %s224
      %p235 = scmp.eq.s32.totalorder %s23, 0
      %p236 = por %p234, %p235
      %p237 = scmp.ne.s32.totalorder %s223, %s224
      %p238 = scmp.eq.s32.totalorder %s24, 1
      %p239 = por %p237, %p238
      %p241 = scmp.ne.s32.totalorder %s224, %s240
      %p242 = scmp.eq.s32.totalorder %s24, 0
      %p243 = por %p241, %p242
      %p244 = scmp.le.s32.totalorder 1, %s18
      %p245 = scmp.lt.s32.totalorder %s18, 3
      %p246 = pnand %p244, %p245
      %p247 = pneg %p246
      // Predicated region
      $region9: #{tpu_custom_call.1} parent=5 // pred_check
        _
      $region10: #{tpu_custom_call.1} parent=5 // pred_check_branch
        %249 = sbr.rel (%p246) target = $region12
      $region11: #{tpu_custom_call.1} parent=5 // pred_region
        %s250 = ssub.s32 %s18, 1
        // Predicated region
        $region13: #{tpu_custom_call.1} parent=11 // pred_check
          %p251 = pneg %p84
        $region14: #{tpu_custom_call.1} parent=11 // pred_check_branch
          %253 = sbr.rel (%p251) target = $region16
        $region15: #{tpu_custom_call.1} parent=11 // pred_region
          %p254 = scmp.lt.s32.totalorder %s27, 0
          %s255 = scalar_select %p254, %s27, 0
          %s256 = smul.addr %s255, 4
          %s257 = scalar_lea.vmem %s1, %s256
        $region16: #{tpu_custom_call.1} parent=11 // pred_fallthru
          _
        // Predicated region
        $region17: #{tpu_custom_call.1} parent=11 // pred_check
          %p258 = pneg %p105
        $region18: #{tpu_custom_call.1} parent=11 // pred_check_branch
          %260 = sbr.rel (%p258) target = $region20
        $region19: #{tpu_custom_call.1} parent=11 // pred_region
          _
        $region20: #{tpu_custom_call.1} parent=11 // pred_fallthru
          _
        // Predicated region
        $region21: #{tpu_custom_call.1} parent=11 // pred_check
          %p261 = pneg %p126
        $region22: #{tpu_custom_call.1} parent=11 // pred_check_branch
          %263 = sbr.rel (%p261) target = $region24
        $region23: #{tpu_custom_call.1} parent=11 // pred_region
          _
        $region24: #{tpu_custom_call.1} parent=11 // pred_fallthru
          _
        // Predicated region
        $region25: #{tpu_custom_call.1} parent=11 // pred_check
          %p264 = pneg %p147
        $region26: #{tpu_custom_call.1} parent=11 // pred_check_branch
          %266 = sbr.rel (%p264) target = $region28
        $region27: #{tpu_custom_call.1} parent=11 // pred_region
          _
        $region28: #{tpu_custom_call.1} parent=11 // pred_fallthru
          _
        // Predicated region
        $region29: #{tpu_custom_call.1} parent=11 // pred_check
          %p267 = pneg %p168
        $region30: #{tpu_custom_call.1} parent=11 // pred_check_branch
          %269 = sbr.rel (%p267) target = $region32
        $region31: #{tpu_custom_call.1} parent=11 // pred_region
          _
        $region32: #{tpu_custom_call.1} parent=11 // pred_fallthru
          _
        // Predicated region
        $region33: #{tpu_custom_call.1} parent=11 // pred_check
          %p270 = pneg %p189
        $region34: #{tpu_custom_call.1} parent=11 // pred_check_branch
          %272 = sbr.rel (%p270) target = $region36
        $region35: #{tpu_custom_call.1} parent=11 // pred_region
          _
        $region36: #{tpu_custom_call.1} parent=11 // pred_fallthru
          _
        // Predicated region
        $region37: #{tpu_custom_call.1} parent=11 // pred_check
          %p273 = pneg %p210
        $region38: #{tpu_custom_call.1} parent=11 // pred_check_branch
          %275 = sbr.rel (%p273) target = $region40
        $region39: #{tpu_custom_call.1} parent=11 // pred_region
          _
        $region40: #{tpu_custom_call.1} parent=11 // pred_fallthru
          _
      $region12: #{tpu_custom_call.1} parent=5 // pred_fallthru
        _
      %p276 = scmp.lt.s32.totalorder %s18, 2
      // Predicated region
      $region41: #{tpu_custom_call.1} parent=5 // pred_check
        %p277 = pneg %p276
      $region42: #{tpu_custom_call.1} parent=5 // pred_check_branch
        %279 = sbr.rel (%p277) target = $region44
      $region43: #{tpu_custom_call.1} parent=5 // pred_region
        // Predicated region
        $region45: #{tpu_custom_call.1} parent=43 // pred_check
          %p280 = pneg %p52
        $region46: #{tpu_custom_call.1} parent=43 // pred_check_branch
          %282 = sbr.rel (%p280) target = $region48
        $region47: #{tpu_custom_call.1} parent=43 // pred_region
          %s283 = sand.u32 %s42, 1
          %s284 = sand.u32 %s42, 1
          %s285 = smul.addr %s284, 24
          %s286 = scalar_lea.vmem [#allocation7], %s285
          %s287 = smul.u32 3, %s25
          %s288 = smul.addr %s287, 2
          %s289 = sadd.s32 %s26, %s288
          %s290 = smul.addr %s289, 8
          %s291 = scalar_lea.vmem %s0, %s290
          // Predicated region
          $region49: #{tpu_custom_call.1} parent=47 // pred_check
            _
          $region50: #{tpu_custom_call.1} parent=47 // pred_check_branch
            %293 = sbr.rel (0) target = $region52
          $region51: #{tpu_custom_call.1} parent=47 // pred_region
            // Predicated region
            $region53: #{tpu_custom_call.1} parent=51 // pred_check
              _
            $region54: #{tpu_custom_call.1} parent=51 // pred_check_branch
              %295 = sbr.rel (0) target = $region56
            $region55: #{tpu_custom_call.1} parent=51 // pred_region
              // Predicated region
              $region68: #{tpu_custom_call.1} parent=55 // pred_check
                _
              $region69: #{tpu_custom_call.1} parent=55 // pred_check_branch
                %314 = sbr.rel (0) target = $region71
              $region70: #{tpu_custom_call.1} parent=55 // pred_region
                loop: start=0, step=1, limit=1
                $region72: #{tpu_custom_call.1} parent=70 // loop_pre_header
                  _
                $region73: #{tpu_custom_call.1} parent=70 // loop_header
                  %s316 = sphi 0, %s320
                  %p317 = scmp.ge.s32.totalorder %s316, 1
                  %s321 = sphi %s291, %s291
                  %s322 = sphi %s286, %s286
                $region74: #{tpu_custom_call.1} parent=70 // loop_header_branch
                  %319 = sbr.rel (%p317) target = $region78
                $region75: #{tpu_custom_call.1} parent=70 // loop_body
                  %v323 = vld [vmem:[%s321] sm:$0xff]
                  %324 = vst [vmem:[%s322] sm:$0xff] %v323
                  %v325 = vld [vmem:[%s321 + $0x10] sm:$0xff]
                  %326 = vst [vmem:[%s322 + $0x8] sm:$0xff] %v325
                  %v327 = vld [vmem:[%s321 + $0x20] sm:$0xff]
                  %328 = vst [vmem:[%s322 + $0x10] sm:$0xff] %v327
                $region76: #{tpu_custom_call.1} parent=70 // loop_footer
                  %s320 = sadd.s32 1, %s316
                $region77: #{tpu_custom_call.1} parent=70 // loop_footer_branch
                  %315 = sbr.rel target = $region73
                $region78: #{tpu_custom_call.1} parent=70 // loop_exit
                  _
              $region71: #{tpu_custom_call.1} parent=55 // pred_fallthru
                _
              // Predicated region
              $region79: #{tpu_custom_call.1} parent=55 // pred_check
                _
              $region80: #{tpu_custom_call.1} parent=55 // pred_check_branch
                %330 = sbr.rel target = $region82
              $region81: #{tpu_custom_call.1} parent=55 // pred_region
                _
              $region82: #{tpu_custom_call.1} parent=55 // pred_fallthru
                _
            $region56: #{tpu_custom_call.1} parent=51 // pred_fallthru
              _
            // Predicated region
            $region57: #{tpu_custom_call.1} parent=51 // pred_check
              _
            $region58: #{tpu_custom_call.1} parent=51 // pred_check_branch
              %297 = sbr.rel target = $region60
            $region59: #{tpu_custom_call.1} parent=51 // pred_region
              loop: start=0, step=1, limit=1
              $region61: #{tpu_custom_call.1} parent=59 // loop_pre_header
                _
              $region62: #{tpu_custom_call.1} parent=59 // loop_header
                %s300 = sphi 0, %s304
                %p301 = scmp.ge.s32.totalorder %s300, 1
                %s305 = sphi %s291, %s291
                %s306 = sphi %s286, %s286
              $region63: #{tpu_custom_call.1} parent=59 // loop_header_branch
                %303 = sbr.rel (%p301) target = $region67
              $region64: #{tpu_custom_call.1} parent=59 // loop_body
                %v307 = vld [vmem:[%s305] sm:$0xff]
                %308 = vst [vmem:[%s306] sm:$0xff] %v307
                %v309 = vld [vmem:[%s305 + $0x10] sm:$0xff]
                %310 = vst [vmem:[%s306 + $0x8] sm:$0xff] %v309
                %v311 = vld [vmem:[%s305 + $0x20] sm:$0xff]
                %312 = vst [vmem:[%s306 + $0x10] sm:$0xff] %v311
              $region65: #{tpu_custom_call.1} parent=59 // loop_footer
                %s304 = sadd.s32 1, %s300
              $region66: #{tpu_custom_call.1} parent=59 // loop_footer_branch
                %299 = sbr.rel target = $region62
              $region67: #{tpu_custom_call.1} parent=59 // loop_exit
                _
            $region60: #{tpu_custom_call.1} parent=51 // pred_fallthru
              _
          $region52: #{tpu_custom_call.1} parent=47 // pred_fallthru
            _
          %331 = vnop
        $region48: #{tpu_custom_call.1} parent=43 // pred_fallthru
          _
      $region44: #{tpu_custom_call.1} parent=5 // pred_fallthru
        _
      %p332 = scmp.le.s32.totalorder 1, %s18
      %p333 = scmp.lt.s32.totalorder %s18, 3
      %p334 = pnand %p332, %p333
      %p335 = pneg %p334
      // Predicated region
      $region83: #{tpu_custom_call.1} parent=5 // pred_check
        _
      $region84: #{tpu_custom_call.1} parent=5 // pred_check_branch
        %337 = sbr.rel (%p334) target = $region86
      $region85: #{tpu_custom_call.1} parent=5 // pred_region
        %s338 = ssub.s32 %s18, 1
        %s339 = sand.u32 %s45, 1
        %s340 = sand.u32 %s45, 1
        %s341 = smul.addr %s340, 24
        %s342 = scalar_lea.vmem [#allocation7], %s341
        // Predicated region
        $region87: #{tpu_custom_call.1} parent=85 // pred_check
          %p343 = pneg %p58
        $region88: #{tpu_custom_call.1} parent=85 // pred_check_branch
          %345 = sbr.rel (%p343) target = $region90
        $region89: #{tpu_custom_call.1} parent=85 // pred_region
          _
        $region90: #{tpu_custom_call.1} parent=85 // pred_fallthru
          _
        %s346 = sand.u32 %s45, 1
        %s347 = sand.u32 %s45, 1
        %s348 = smul.addr %s347, 24
        %s349 = scalar_lea.vmem [#allocation7], %s348
        %p350 = pneg %p58
        %p351 = pneg %p55
        %p352 = scmp.lt.s32.totalorder %s27, 0
        %s353 = scalar_select %p352, %s27, 0
        %s354 = smul.addr %s353, 4
        %s355 = scalar_lea.vmem %s1, %s354
        %p356 = pneg %p84
        %p357 = pneg %p81
        %p358 = pneg %p105
        %p359 = pneg %p102
        %p360 = pneg %p126
        %p361 = pneg %p123
        %p362 = pneg %p147
        %p363 = pneg %p144
        %p364 = pneg %p168
        %p365 = pneg %p165
        %p366 = pneg %p189
        %p367 = pneg %p186
        %p368 = pneg %p210
        %p369 = pneg %p207
        %p370 = pneg %p236
        %p371 = pneg %p233
        %p372 = scmp.lt.s32.totalorder %s27, 0
        %s373 = scalar_select %p372, %s27, 0
        %s374 = smul.addr %s373, 4
        %s375 = scalar_lea.vmem %s8, %s374
        %s376 = smul.u32 3, %s27
        %p377 = scmp.lt.s32.totalorder %s27, 0
        %s378 = scalar_select %p377, %s27, 0
        %s379 = smul.addr %s378, 4
        %s380 = scalar_lea.vmem %s1, %s379
        %p381 = scmp.lt.s32.totalorder %s27, 0
        %s382 = scalar_select %p381, %s27, 0
        %s383 = smul.addr %s382, 4
        %s384 = scalar_lea.vmem %s8, %s383
        %p385 = scmp.eq.s32.totalorder %s28, 0
        // Predicated region
        $region91: #{tpu_custom_call.1} parent=85 // pred_check
          %p386 = pneg %p385
        $region92: #{tpu_custom_call.1} parent=85 // pred_check_branch
          %388 = sbr.rel (%p386) target = $region94
        $region93: #{tpu_custom_call.1} parent=85 // pred_region
          %vm389 = vcmask 2048
          %390 = vst.msk [vmem:[#allocation2] sm:$0x7] %vm389, -inf
          %391 = vst.msk [vmem:[#allocation3] sm:$0x7] %vm389, 0.0
          %vm392 = vcmask 256000
          %393 = vst.msk [vmem:[#allocation4] sm:$0x7] %vm392, 0.0
        $region94: #{tpu_custom_call.1} parent=85 // pred_fallthru
          _
        %v394 = vld [vmem:[%s342] sm:$0xff]
        %v395 = vld [vmem:[%s342 + $0x8] sm:$0xff]
        %v396 = vld [vmem:[%s342 + $0x10] sm:$0xff]
        %v397 = vld [vmem:[%s380] sm:$0x7]
        %s398 = smul.u32 %s28, 8
        %v399 = vlaneseq
        %v400 = vshrl.u32 %v399, 7
        %v401 = vstv %s398
        %v402 = vadd.s32 %v401, %v400
        %v404 = vunpack.c.l.s4 1966171168
        %v405 = vunpack.c.0.s8 %v404
        %v406 = vlaneseq
        %v407 = vshrl.u32 %v406, 7
        %v408 = vsub.s32 %v405, %v407
        %v409 = vrot.slane %v397, %v408
        %v410 = vcombine.high %v409, %v409
        %v412 = vunpack.c.l.s4 1966171168
        %v413 = vunpack.c.0.s8 %v412
        %v414 = vlaneseq
        %v415 = vshrl.u32 %v414, 7
        %v416 = vsub.s32 %v413, %v415
        %v417 = vrot.slane %v409, %v416
        %v419 = vunpack.c.l.s4 1966171168
        %v420 = vunpack.c.0.s8 %v419
        %v421 = vlaneseq
        %v422 = vshrl.u32 %v421, 7
        %v423 = vsub.s32 %v420, %v422
        %v424 = vrot.slane %v410, %v423
        %v425 = vcombine.high %v417, %v417
        %v426 = vlaneseq
        %v427 = vshrl.u32 %v426, 7
        %v428 = vsub.s32 0, %v427
        %v429 = vrot.slane %v417, %v428
        %v430 = vlaneseq
        %v431 = vshrl.u32 %v430, 7
        %v432 = vsub.s32 0, %v431
        %v433 = vrot.slane %v424, %v432
        %v434 = vlaneseq
        %v435 = vshrl.u32 %v434, 7
        %v436 = vsub.s32 0, %v435
        %v437 = vrot.slane %v425, %v436
        %438 = vset.pattern.permute.xlu0 0
        %439 = vperm.xlu0 %438, %v429
        %v440 = vpop.permute.xlu0 %439
        %441 = vset.pattern.permute.xlu0 0
        %442 = vperm.xlu0 %441, %v433
        %v443 = vpop.permute.xlu0 %442
        %444 = vset.pattern.permute.xlu0 0
        %445 = vperm.xlu0 %444, %v437
        %v446 = vpop.permute.xlu0 %445
        %vm447 = vcmp.lt.s32.totalorder %v402, %v440
        %vm448 = vcmp.lt.s32.totalorder %v402, %v443
        %vm449 = vcmp.lt.s32.totalorder %v402, %v446
        %v450 = vsel %vm447, %v394, 0.0
        %v451 = vsel %vm448, %v395, 0.0
        %v452 = vsel %vm449, %v396, 0.0
        %v453 = vld [vmem:[%s2] sm:$0xff]
        %v454 = vld [vmem:[%s2 + $0x8] sm:$0xff]
        %v455 = vld [vmem:[%s2 + $0x10] sm:$0xff]
        %v456 = vld [vmem:[%s2 + $0x18] sm:$0xff]
        %v457 = vld [vmem:[%s3] sm:$0x1]
        %v459 = vlaneseq
        %v460 = vshrl.u32 %v459, 7
        %v461 = vsub.s32 0, %v460
        %v462 = vrot.slane %v457, %v461
        %vm464 = vcmask 261120
        %v466 = vsel %vm464, %v450, 0
        %v469 = vsel %vm464, %v451, 0
        %v472 = vsel %vm464, %v452, 0
        %474 = vmatprep.subr.mxu0 0.0
        %475 = vmatpush1.msra.mxu0 %v453
        %476 = vmatprep.subr.mxu0 0.0
        %477 = vmatpush1.msra.mxu0 %v454
        %478 = vmatprep.subr.mxu0 0.0
        %479 = vmatpush1.msra.mxu0 %v455
        %480 = vmatprep.subr.mxu0 0.0
        %481 = vmatpush1.msra.mxu0 %v456
        %482 = vmatprep.subr.mxu0 0.0
        %483 = vmatpush1.msra.mxu0 0.0
        %484 = vmatprep.subr.mxu0 0.0
        %485 = vmatpush1.msra.mxu0 0.0
        %486 = vmatprep.subr.mxu0 0.0
        %487 = vmatpush1.msra.mxu0 0.0
        %488 = vmatprep.subr.mxu0 0.0
        %489 = vmatpush1.msra.mxu0 0.0
        %490 = vmatprep.subr.mxu0 0.0
        %491 = vmatpush1.msra.mxu0 0.0
        %492 = vmatprep.subr.mxu0 0.0
        %493 = vmatpush1.msra.mxu0 0.0
        %494 = vmatprep.subr.mxu0 0.0
        %495 = vmatpush1.msra.mxu0 0.0
        %496 = vmatprep.subr.mxu0 0.0
        %497 = vmatpush1.msra.mxu0 0.0
        %498 = vmatprep.subr.mxu0 0.0
        %499 = vmatpush1.msra.mxu0 0.0
        %500 = vmatprep.subr.mxu0 0.0
        %501 = vmatpush1.msra.mxu0 0.0
        %502 = vmatprep.subr.mxu0 0.0
        %503 = vmatpush1.msra.mxu0 0.0
        %504 = vmatprep.subr.mxu0 0.0
        %505 = vmatpush1.msra.mxu0 0.0
        %506 = vmatprep.subr.mxu0 0.0
        %507 = vmatpush1.msra.mxu0 0.0
        %508 = vmatprep.subr.mxu0 0.0
        %509 = vmatpush1.msra.mxu0 0.0
        %510 = vmatprep.subr.mxu0 0.0
        %511 = vmatpush1.msra.mxu0 0.0
        %512 = vmatprep.subr.mxu0 0.0
        %513 = vmatpush1.msra.mxu0 0.0
        %514 = vmatprep.subr.mxu0 0.0
        %515 = vmatpush1.msra.mxu0 0.0
        %516 = vmatprep.subr.mxu0 0.0
        %517 = vmatpush1.msra.mxu0 0.0
        %518 = vmatprep.subr.mxu0 0.0
        %519 = vmatpush1.msra.mxu0 0.0
        %520 = vmatprep.subr.mxu0 0.0
        %521 = vmatpush1.msra.mxu0 0.0
        %522 = vmatprep.subr.mxu0 0.0
        %523 = vmatpush1.msra.mxu0 0.0
        %524 = vmatprep.subr.mxu0 0.0
        %525 = vmatpush1.msra.mxu0 0.0
        %526 = vmatprep.subr.mxu0 0.0
        %527 = vmatpush1.msra.mxu0 0.0
        %528 = vmatprep.subr.mxu0 0.0
        %529 = vmatpush1.msra.mxu0 0.0
        %530 = vmatprep.subr.mxu0 0.0
        %531 = vmatpush1.msra.mxu0 0.0
        %532 = vmatprep.subr.mxu0 0.0
        %533 = vmatpush1.msra.mxu0 0.0
        %534 = vmatprep.subr.mxu0 0.0
        %535 = vmatpush1.msra.mxu0 0.0
        %536 = vmatprep.subr.mxu0 0.0
        %537 = vmatpush1.msra.mxu0 0.0
        %538 = vmatprep.mubr.f32.mxu0 0.0
        %539 = vmatmul.mubr.f32.gmra.mrb[0].mxu0 %v466
        %v540 = vpop.f32.mrb[0].mxu0
        %v541 = vadd.f32 %v462, %v540
        %v542 = vpop.f32.mrb[0].mxu0
        %543 = vmatprep.mubr.f32.mxu0 0.0
        %544 = vmatmul.mubr.f32.gmra.mrb[0].mxu0 %v469
        %v545 = vpop.f32.mrb[0].mxu0
        %v546 = vadd.f32 %v462, %v545
        %v547 = vpop.f32.mrb[0].mxu0
        %548 = vmatprep.mubr.f32.mxu0 0.0
        %549 = vmatmul.mubr.f32.gmra.mrb[0].mxu0 %v472
        %v550 = vpop.f32.mrb[0].mxu0
        %v551 = vadd.f32 %v462, %v550
        %v552 = vpop.f32.mrb[0].mxu0
        %553 = vdwg.mxu0
        %v554 = vmax.f32 %v541, 0.0
        %v555 = vmax.f32 %v546, 0.0
        %v556 = vmax.f32 %v551, 0.0
        %v557 = vld [vmem:[%s4] sm:$0x1]
        %v559 = vlaneseq
        %v560 = vshrl.u32 %v559, 7
        %v561 = vsub.s32 0, %v560
        %v562 = vrot.slane %v557, %v561
        %v564 = vmul.f32 %v554, %v562
        %v565 = vmul.f32 %v555, %v562
        %v566 = vmul.f32 %v556, %v562
        %vm567 = vcmask 130048
        %v568 = vsel %vm567, %v564, 0.0
        %569 = vadd.xlane.f32.xlu0 %v568
        %v570 = vpop.xlane.xlu0 %569
        %v571 = vsel %vm567, %v565, 0.0
        %572 = vadd.xlane.f32.xlu0 %v571
        %v573 = vpop.xlane.xlu0 %572
        %v574 = vsel %vm567, %v566, 0.0
        %575 = vadd.xlane.f32.xlu0 %v574
        %v576 = vpop.xlane.xlu0 %575
        %v577 = vld [vmem:[#allocation5] sm:$0x1]
        %v579 = vlaneseq
        %v580 = vshrl.u32 %v579, 7
        %v581 = vsub.s32 0, %v580
        %v582 = vrot.slane %v577, %v581
        %583 = vset.pattern.permute.xlu0 0
        %584 = vperm.xlu0 %583, %v582
        %v585 = vpop.permute.xlu0 %584
        %v587 = vadd.f32 %v570, %v585
        %v588 = vadd.f32 %v573, %v585
        %v589 = vadd.f32 %v576, %v585
        %v590 = vlaneseq
        %v591 = vand.u32 %v590, 127
        %v592 = vadd.s32 %v401, %v591
        %593 = vset.pattern.permute.xlu0 0
        %594 = vperm.xlu0 %593, %v397
        %v595 = vpop.permute.xlu0 %594
        %vm596 = vcmp.lt.s32.totalorder %v592, %v595
        %v600 = vlaneseq
        %v601 = vshrl.u32 %v600, 7
        %v602 = vsub.s32 %v591, %v601
        %v603 = vrot.slane %v587, %v602
        %v604 = vlaneseq
        %v605 = vshrl.u32 %v604, 7
        %v606 = vsub.s32 %v591, %v605
        %v607 = vrot.slane %v588, %v606
        %v608 = vlaneseq
        %v609 = vshrl.u32 %v608, 7
        %v610 = vsub.s32 %v591, %v609
        %v611 = vrot.slane %v589, %v610
        %vm612 = vcmask 1041409
        %v613 = vsel %vm612, %v607, %v603
        %vm614 = vcmask 1042434
        %v615 = vsel %vm614, %v611, %v613
        %v617 = vsel %vm596, %v615, -inf
        %v618 = vld [vmem:[#allocation2] sm:$0x7]
        %vm619 = vcmask 59392
        %v620 = vsel %vm619, %v617, -inf
        %621 = vmax.xlane.f32.xlu0 %v620
        %v622 = vpop.xlane.xlu0 %621
        %v623 = vmax.f32 %v618, %v622
        %v624 = vsub.f32 %v618, %v623
        %v625 = vmul.f32 %v624, 1.442695
        %v626 = vpow.pop %v625
        %628 = vset.pattern.permute.xlu0 0
        %629 = vperm.xlu0 %628, %v623
        %v630 = vpop.permute.xlu0 %629
        %v632 = vsub.f32 %v617, %v630
        %v633 = vmul.f32 %v632, 1.442695
        %v634 = vpow.pop %v633
        %v635 = vld [vmem:[#allocation3] sm:$0x7]
        %v636 = vmul.f32 %v626, %v635
        %v637 = vsel %vm619, %v634, 0.0
        %638 = vadd.xlane.f32.xlu0 %v637
        %v639 = vpop.xlane.xlu0 %638
        %v640 = vadd.f32 %v636, %v639
        %vm641 = vcmask 2048
        %642 = vst.msk [vmem:[#allocation3] sm:$0x7] %vm641, %v640
        %v643 = vld [vmem:[#allocation4] sm:$0x7]
        %645 = vset.pattern.permute.xlu0 0
        %646 = vperm.xlu0 %645, %v626
        %v647 = vpop.permute.xlu0 %646
        %v649 = vmul.f32 %v647, %v643
        %v650 = vlaneseq
        %v651 = vshrl.u32 %v650, 7
        %v652 = vsub.s32 0, %v651
        %v653 = vrot.slane %v634, %v652
        %655 = vbcast.lane.b32.xlu0 %v653, 256
        %v656 = vpop.permute.xlu0 %655
        %v657 = vlaneseq
        %v658 = vshrl.u32 %v657, 7
        %v659 = vsub.s32 1, %v658
        %v660 = vrot.slane %v634, %v659
        %662 = vbcast.lane.b32.xlu0 %v660, 256
        %v663 = vpop.permute.xlu0 %662
        %v664 = vlaneseq
        %v665 = vshrl.u32 %v664, 7
        %v666 = vsub.s32 2, %v665
        %v667 = vrot.slane %v634, %v666
        %669 = vbcast.lane.b32.xlu0 %v667, 256
        %v670 = vpop.permute.xlu0 %669
        %v671 = vmul.f32 %v656, %v450
        %v672 = vmul.f32 %v663, %v451
        %v673 = vmul.f32 %v670, %v452
        %v674 = vsel %vm464, %v671, 0.0
        %v675 = vrot.slane %v674, 4
        %v676 = vadd.f32 %v674, %v675
        %v677 = vrot.slane %v676, 2
        %v678 = vadd.f32 %v676, %v677
        %v679 = vrot.slane %v678, 1
        %v680 = vadd.f32 %v678, %v679
        %v681 = vsel %vm464, %v672, 0.0
        %v682 = vrot.slane %v681, 4
        %v683 = vadd.f32 %v681, %v682
        %v684 = vrot.slane %v683, 2
        %v685 = vadd.f32 %v683, %v684
        %v686 = vrot.slane %v685, 1
        %v687 = vadd.f32 %v685, %v686
        %v688 = vsel %vm464, %v673, 0.0
        %v689 = vrot.slane %v688, 4
        %v690 = vadd.f32 %v688, %v689
        %v691 = vrot.slane %v690, 2
        %v692 = vadd.f32 %v690, %v691
        %v693 = vrot.slane %v692, 1
        %v694 = vadd.f32 %v692, %v693
        %v698 = vsel %vm612, %v687, %v680
        %v699 = vsel %vm614, %v694, %v698
        %v701 = vadd.f32 %v649, %v699
        %vm702 = vcmask 256000
        %703 = vst.msk [vmem:[#allocation4] sm:$0x7] %vm702, %v701
        %704 = vst.msk [vmem:[#allocation2] sm:$0x7] %vm641, %v623
        %p705 = scmp.eq.s32.totalorder %s28, 1
        // Predicated region
        $region95: #{tpu_custom_call.1} parent=85 // pred_check
          %p706 = pneg %p705
        $region96: #{tpu_custom_call.1} parent=85 // pred_check_branch
          %708 = sbr.rel (%p706) target = $region98
        $region97: #{tpu_custom_call.1} parent=85 // pred_region
          %v709 = vld [vmem:[#allocation4] sm:$0x7]
          %v710 = vld [vmem:[#allocation3] sm:$0x7]
          %712 = vset.pattern.permute.xlu0 0
          %713 = vperm.xlu0 %712, %v710
          %v714 = vpop.permute.xlu0 %713
          %v716 = vrcp.pop %v714
          %v717 = vmul.f32 %v709, %v716
          %v718 = vld [vmem:[%s6] sm:$0x1]
          %v720 = vlaneseq
          %v721 = vshrl.u32 %v720, 7
          %v722 = vsub.s32 0, %v721
          %v723 = vrot.slane %v718, %v722
          %v725 = vmul.f32 %v717, %v723
          %v726 = vsel %vm702, %v725, 0.0
          %727 = vadd.xlane.f32.xlu0 %v726
          %v728 = vpop.xlane.xlu0 %727
          %v729 = vld [vmem:[#allocation6] sm:$0x1]
          %v731 = vlaneseq
          %v732 = vshrl.u32 %v731, 7
          %v733 = vsub.s32 0, %v732
          %v734 = vrot.slane %v729, %v733
          %v736 = vadd.f32 %v728, %v734
          %737 = vst.msk [vmem:[%s384] sm:$0x7] %vm641, %v736
        $region98: #{tpu_custom_call.1} parent=85 // pred_fallthru
          _
        %p738 = scmp.lt.s32.totalorder %s27, 0
        %s739 = scalar_select %p738, %s27, 0
        %s740 = smul.addr %s739, 4
        %s741 = scalar_lea.vmem %s8, %s740
        // Predicated region
        $region99: #{tpu_custom_call.1} parent=85 // pred_check
          %p742 = pneg %p233
        $region100: #{tpu_custom_call.1} parent=85 // pred_check_branch
          %744 = sbr.rel (%p742) target = $region102
        $region101: #{tpu_custom_call.1} parent=85 // pred_region
          _
        $region102: #{tpu_custom_call.1} parent=85 // pred_fallthru
          _
        // Predicated region
        $region103: #{tpu_custom_call.1} parent=85 // pred_check
          %p745 = pneg %p233
        $region104: #{tpu_custom_call.1} parent=85 // pred_check_branch
          %747 = sbr.rel (%p745) target = $region106
        $region105: #{tpu_custom_call.1} parent=85 // pred_region
          %p748 = scmp.lt.s32.totalorder %s27, 0
          %s749 = scalar_select %p748, %s27, 0
          %s750 = smul.addr %s749, 4
          %s751 = scalar_lea.vmem %s8, %s750
        $region106: #{tpu_custom_call.1} parent=85 // pred_fallthru
          _
      $region86: #{tpu_custom_call.1} parent=5 // pred_fallthru
        _
      %p752 = scmp.le.s32.totalorder 2, %s18
      // Predicated region
      $region107: #{tpu_custom_call.1} parent=5 // pred_check
        %p753 = pneg %p752
      $region108: #{tpu_custom_call.1} parent=5 // pred_check_branch
        %755 = sbr.rel (%p753) target = $region110
      $region109: #{tpu_custom_call.1} parent=5 // pred_region
        %s756 = ssub.s32 %s18, 2
      $region110: #{tpu_custom_call.1} parent=5 // pred_fallthru
        _
    $region6: #{tpu_custom_call.1} parent=1 // loop_footer
      %s22 = sadd.s32 1, %s18
    $region7: #{tpu_custom_call.1} parent=1 // loop_footer_branch
      %17 = sbr.rel target = $region3
    $region8: #{tpu_custom_call.1} parent=1 // loop_exit
      _

</llo_original>
